<compile_context>
chip_gen: v6e
topology: v6e:2x2x1
jax: 0.10.0
libtpu: 0.0.40
codegen_flags: <defaults>
</compile_context>

<pallas_src>
import jax
import jax.numpy as jnp
import numpy as np
from jax.experimental import pallas as pl
from jax.experimental.pallas import tpu as pltpu


# ----------------------------------------------------------------------------
# Tiling helpers
# ----------------------------------------------------------------------------
_MAX_TILE_B = 2048                      # lane-axis tile cap (multiple of 128)
_BLOCK_BYTES_BUDGET = 4 * 1024 * 1024   # per-block budget (scaled by class count)
_VMEM_LIMIT_BYTES = 32 * 1024 * 1024


def _round_up(x, m):
    return ((x + m - 1) // m) * m


def _tile_b(b, num_rows, itemsize):
    cap = (_BLOCK_BYTES_BUDGET // max(1, num_rows * itemsize)) // 128 * 128
    cap = max(128, min(_MAX_TILE_B, cap))
    return min(cap, _round_up(b, 128))


# ----------------------------------------------------------------------------
# Kernels (factories close over static sizes)
# ----------------------------------------------------------------------------
def _make_ce_acc_kernel(b_total, n_inner, num_classes, tb):
    """Fused cross-entropy-sum + correct-count over lane-dense [C, TILE_B] blocks.

    Output is an (n_outer, 1, 2) f32 accumulator: out[c, 0, 0] = sum of per-example
    CE losses handled by core-slice c, out[c, 0, 1] = number of correct argmax
    predictions. Normalization (divide by B) happens in the jitted wrapper.
    """

    def kernel(x_ref, lab_ref, out_ref):
        c = pl.program_id(0)
        i = pl.program_id(1)

        @pl.when(i == 0)
        def _init():
            out_ref[...] = jnp.zeros_like(out_ref)

        x = x_ref[...].astype(jnp.float32)          # (C, TB), upcast in-kernel (VPU)
        lab = lab_ref[...]                          # (1, TB) int32

        # validity mask for the (unpadded) partial last tile
        g = c * n_inner + i                         # global column-block index
        col = jax.lax.broadcasted_iota(jnp.int32, (1, tb), 1) + g * tb
        valid = col < b_total                       # (1, TB) bool

        row = jax.lax.broadcasted_iota(jnp.int32, (num_classes, tb), 0)

        # numerically-stable log-sum-exp over the class (sublane) axis
        m = jnp.max(x, axis=0, keepdims=True)                               # (1, TB)
        lse = m + jnp.log(jnp.sum(jnp.exp(x - m), axis=0, keepdims=True))   # (1, TB)

        # gather logit at the label index via masked select (no dynamic gather)
        picked = jnp.sum(jnp.where(row == lab, x, 0.0), axis=0, keepdims=True)
        per_ex = jnp.where(valid, lse - picked, 0.0)                        # (1, TB)

        # argmax over classes (first occurrence), reusing m
        pred = jnp.min(jnp.where(x == m, row, num_classes), axis=0, keepdims=True)
        correct = jnp.where((pred == lab) & valid, 1.0, 0.0)                # (1, TB)

        loss_sum = jnp.sum(per_ex, axis=1, keepdims=True)                   # (1, 1)
        acc_sum = jnp.sum(correct, axis=1, keepdims=True)                   # (1, 1)

        # pack [loss_sum, acc_sum] into the (1, 1, 2) accumulator block
        sel = jax.lax.broadcasted_iota(jnp.int32, (1, 2), 1)
        upd = jnp.where(sel == 0, loss_sum, acc_sum)                        # (1, 2)
        out_ref[...] += upd[None]

    return kernel


def _make_acc_kernel(b_total, rows_per_blk, lanes):
    """Correct-count over sublane-dense (rows_per_blk, lanes) int32 blocks."""

    def kernel(pred_ref, lab_ref, out_ref):
        i = pl.program_id(0)

        @pl.when(i == 0)
        def _init():
            out_ref[...] = jnp.zeros_like(out_ref)

        row = jax.lax.broadcasted_iota(jnp.int32, (rows_per_blk, lanes), 0)
        lane = jax.lax.broadcasted_iota(jnp.int32, (rows_per_blk, lanes), 1)
        idx = (i * rows_per_blk + row) * lanes + lane
        valid = idx < b_total

        correct = jnp.where((pred_ref[...] == lab_ref[...]) & valid, 1.0, 0.0)
        part = jnp.sum(correct, axis=1, keepdims=True)      # lane reduce  -> (R, 1)
        out_ref[...] += jnp.sum(part, axis=0, keepdims=True)  # sublane reduce -> (1, 1)

    return kernel


# ----------------------------------------------------------------------------
# Wrappers (jitted: one cached executable per static shape)
# ----------------------------------------------------------------------------
@jax.jit
def loss_and_accuracy(logits, labels):
    """Fused: CrossEntropyLoss(logits.view(-1,N), label.view(-1)) + argmax accuracy."""
    num_classes = logits.shape[-1]
    x = logits.reshape(-1, num_classes)                       # native dtype
    lab2 = labels.reshape(-1).astype(jnp.int32).reshape(1, -1)
    b = x.shape[0]

    tb = _tile_b(b, num_classes, jnp.dtype(x.dtype).itemsize)
    n_tiles = -(-b // tb)
    # Split the reduction across two core-slices when evenly possible:
    # exploits both TensorCores on v7x, degenerates to a plain loop on v5e/v6e.
    n_outer = 2 if (n_tiles >= 2 and n_tiles % 2 == 0) else 1
    n_inner = n_tiles // n_outer

    # Layout plumbing: examples -> 128-lane axis, classes -> sublanes.
    # allow_input_fusion lets XLA fuse this transpose into the Pallas input
    # instead of materializing a second HBM copy of the logits.
    xt = jnp.transpose(x)                                     # (C, B)

    sums = pl.pallas_call(
        _make_ce_acc_kernel(b, n_inner, num_classes, tb),
        out_shape=jax.ShapeDtypeStruct((n_outer, 1, 2), jnp.float32),
        grid=(n_outer, n_inner),
        in_specs=[
            pl.BlockSpec((num_classes, tb), lambda c, i: (0, c * n_inner + i)),
            pl.BlockSpec((1, tb), lambda c, i: (0, c * n_inner + i)),
        ],
        out_specs=pl.BlockSpec((1, 1, 2), lambda c, i: (c, 0, 0)),
        compiler_params=pltpu.CompilerParams(
            dimension_semantics=("parallel", "arbitrary"),
            vmem_limit_bytes=_VMEM_LIMIT_BYTES,
            allow_input_fusion=[True, False]),
    )(xt, lab2)

    totals = jnp.sum(sums, axis=0)            # (1, 2): combine the core-slices
    loss = totals[0, 0] / b
    acc = totals[0, 1] / b
    return loss, acc


@jax.jit
def accuracy(pred, labels):
    """Equivalent of torch.mean((pred.view(-1) == label.view(-1)).float())."""
    p = pred.reshape(-1).astype(jnp.int32)
    l = labels.reshape(-1).astype(jnp.int32)
    b = p.shape[0]

    rows_per_blk, lanes = 8, 1024
    blk_elems = rows_per_blk * lanes
    bp = _round_up(b, blk_elems)
    if bp != b:
        # int32 pad is a few KB and fuses under jit; the in-kernel validity
        # mask (not the pad values) keeps padded elements out of the count.
        p = jnp.pad(p, (0, bp - b))
        l = jnp.pad(l, (0, bp - b), constant_values=-1)
    rows = bp // lanes
    p2 = p.reshape(rows, lanes)
    l2 = l.reshape(rows, lanes)

    out = pl.pallas_call(
        _make_acc_kernel(b, rows_per_blk, lanes),
        out_shape=jax.ShapeDtypeStruct((1, 1), jnp.float32),
        grid=(rows // rows_per_blk,),
        in_specs=[
            pl.BlockSpec((rows_per_blk, lanes), lambda i: (i, 0)),
            pl.BlockSpec((rows_per_blk, lanes), lambda i: (i, 0)),
        ],
        out_specs=pl.BlockSpec((1, 1), lambda i: (0, 0)),
        compiler_params=pltpu.CompilerParams(
            dimension_semantics=("arbitrary",),
            vmem_limit_bytes=_VMEM_LIMIT_BYTES),
    )(p2, l2)
    return out[0, 0] / b


class FewShotREModel:
    """JAX/Pallas port of the abstract FewShotREModel base class."""

    def __init__(self, sentence_encoder=None):
        # sentence_encoder is an abstract dependency with no defined computation here.
        self.sentence_encoder = sentence_encoder
        # self.cost == cross-entropy, implemented by the fused Pallas kernel above.

    def forward(self, support, query, N, K, Q):
        # TODO(synk): forward raises NotImplementedError in the reference module
        # (subclasses define it via sentence_encoder); no computation to translate.
        raise NotImplementedError

    def loss(self, logits, label):
        loss_val, _ = loss_and_accuracy(logits, label)
        return loss_val

    def accuracy(self, pred, label):
        return accuracy(pred, label)

    def loss_and_accuracy(self, logits, label):
        # Fused fast path: one pass over the logits yields both loss and accuracy.
        return loss_and_accuracy(logits, label)


# ----------------------------------------------------------------------------
# Demo / self-check
# ----------------------------------------------------------------------------
if __name__ == "__main__":
    model = FewShotREModel(sentence_encoder=None)

    def check(b, c, key):
        k1, k2 = jax.random.split(key)
        logits = jax.random.normal(k1, (b, c), dtype=jnp.float32)
        labels = jax.random.randint(k2, (b,), 0, c, dtype=jnp.int32)

        loss_val, acc_val = model.loss_and_accuracy(logits, labels)
        jax.block_until_ready((loss_val, acc_val))

        pred = jnp.argmax(logits, axis=-1).astype(jnp.int32)
        acc_standalone = model.accuracy(pred, labels)
        jax.block_until_ready(acc_standalone)

        # Pure-JAX references.
        logp = jax.nn.log_softmax(logits, axis=-1)
        ref_loss = -jnp.mean(logp[jnp.arange(b), labels])
        ref_acc = jnp.mean((pred == labels).astype(jnp.float32))

        assert np.allclose(np.asarray(loss_val), np.asarray(ref_loss),
                           rtol=1e-5, atol=1e-5), (float(loss_val), float(ref_loss))
        assert np.allclose(np.asarray(acc_val), np.asarray(ref_acc),
                           rtol=1e-5, atol=1e-6), (float(acc_val), float(ref_acc))
        assert np.allclose(np.asarray(acc_standalone), np.asarray(ref_acc),
                           rtol=1e-5, atol=1e-6), (float(acc_standalone), float(ref_acc))

    key = jax.random.PRNGKey(0)
    k_a, k_b, k_c = jax.random.split(key, 3)

    # Few-shot episode: N=5 classes, Q=3 queries/class -> B = N*Q = 15
    # (single partial tile, masked).
    check(5 * 3, 5, k_a)
    # Even tile count -> exercises the 2-way core-split grid + partial last tile.
    check(3000, 5, k_b)
    # Odd tile count -> exercises 1-D multi-tile accumulation + partial last tile.
    check(5000, 7, k_c)

    print("KERNEL_OK")
</pallas_src>

<mosaic_0001>
module attributes {stable_mosaic.version = 11 : i64} {
  func.func @kernel(%arg0: i32, %arg1: i32, %arg2: memref<5x128xf32, #tpu.memory_space<vmem>>, %arg3: memref<1x128xi32, #tpu.memory_space<vmem>>, %arg4: memref<1x1x2xf32, #tpu.memory_space<vmem>>) attributes {dimension_semantics = [#tpu.dimension_semantics<parallel>, #tpu.dimension_semantics<arbitrary>], iteration_bounds = array<i64: 1, 1>, scalar_prefetch = 0 : i64, scratch_operands = 0 : i64, tpu.core_type = #tpu.core_type<tc>, window_params = [{transform_indices = @transform_0, window_bounds = array<i64: 5, 128>}, {transform_indices = @transform_1, window_bounds = array<i64: 1, 128>}, {transform_indices = @transform_2, window_bounds = array<i64: 1, 1, 2>}]} {
    %c0_i32 = arith.constant 0 : i32
    %0 = arith.cmpi eq, %arg1, %c0_i32 : i32
    %1 = arith.extui %0 : i1 to i32
    %c0_i32_0 = arith.constant 0 : i32
    %2 = arith.cmpi ne, %1, %c0_i32_0 : i32
    scf.if %2 {
      %cst_20 = arith.constant 0.000000e+00 : f32
      %59 = vector.broadcast %cst_20 : f32 to vector<1x1x2xf32>
      %c0_21 = arith.constant 0 : index
      %c0_22 = arith.constant 0 : index
      %c0_23 = arith.constant 0 : index
      %60 = vector.load %arg4[%c0_21, %c0_22, %c0_23] : memref<1x1x2xf32, #tpu.memory_space<vmem>>, vector<1x1x2xf32>
      tpu.vector_store %arg4[%c0_21, %c0_22, %c0_23], %59 {strides = array<i32>} : memref<1x1x2xf32, #tpu.memory_space<vmem>>, vector<1x1x2xf32>,
    } else {
    }
    %c0 = arith.constant 0 : index
    %c0_1 = arith.constant 0 : index
    %3 = vector.load %arg2[%c0, %c0_1] : memref<5x128xf32, #tpu.memory_space<vmem>>, vector<5x128xf32>
    %c0_2 = arith.constant 0 : index
    %c0_3 = arith.constant 0 : index
    %4 = vector.load %arg3[%c0_2, %c0_3] : memref<1x128xi32, #tpu.memory_space<vmem>>, vector<1x128xi32>
    %c1_i32 = arith.constant 1 : i32
    %5 = arith.muli %arg0, %c1_i32 : i32
    %6 = arith.addi %5, %arg1 : i32
    %7 = tpu.iota {dimensions = array<i32: 1>} : vector<1x128xi32>
    %c128_i32 = arith.constant 128 : i32
    %8 = arith.muli %6, %c128_i32 : i32
    %9 = vector.broadcast %8 : i32 to vector<1x128xi32>
    %10 = arith.addi %7, %9 : vector<1x128xi32>
    %c15_i32 = arith.constant 15 : i32
    %11 = vector.broadcast %c15_i32 : i32 to vector<1x128xi32>
    %12 = arith.cmpi slt, %10, %11 : vector<1x128xi32>
    %13 = tpu.iota {dimensions = array<i32: 0>} : vector<5x128xi32>
    %cst = arith.constant dense<0xFF800000> : vector<128xf32>
    %14 = vector.multi_reduction <maximumf>, %3, %cst [0] : vector<5x128xf32> to vector<128xf32>
    %15 = vector.shape_cast %14 : vector<128xf32> to vector<1x128xf32>
    %16 = vector.broadcast %15 : vector<1x128xf32> to vector<5x128xf32>
    %17 = arith.subf %3, %16 : vector<5x128xf32>
    %18 = math.exp %17 : vector<5x128xf32>
    %cst_4 = arith.constant dense<0.000000e+00> : vector<128xf32>
    %19 = vector.multi_reduction <add>, %18, %cst_4 [0] : vector<5x128xf32> to vector<128xf32>
    %20 = vector.shape_cast %19 : vector<128xf32> to vector<1x128xf32>
    %21 = math.log %20 : vector<1x128xf32>
    %22 = arith.addf %15, %21 : vector<1x128xf32>
    %23 = vector.broadcast %4 : vector<1x128xi32> to vector<5x128xi32>
    %24 = arith.cmpi eq, %13, %23 : vector<5x128xi32>
    %cst_5 = arith.constant 0.000000e+00 : f32
    %25 = vector.broadcast %cst_5 : f32 to vector<5x128xf32>
    %26 = arith.select %24, %3, %25 : vector<5x128xi1>, vector<5x128xf32>
    %cst_6 = arith.constant dense<0.000000e+00> : vector<128xf32>
    %27 = vector.multi_reduction <add>, %26, %cst_6 [0] : vector<5x128xf32> to vector<128xf32>
    %28 = vector.shape_cast %27 : vector<128xf32> to vector<1x128xf32>
    %29 = arith.subf %22, %28 : vector<1x128xf32>
    %cst_7 = arith.constant 0.000000e+00 : f32
    %30 = vector.broadcast %cst_7 : f32 to vector<1x128xf32>
    %31 = arith.select %12, %29, %30 : vector<1x128xi1>, vector<1x128xf32>
    %32 = vector.broadcast %15 : vector<1x128xf32> to vector<5x128xf32>
    %33 = arith.cmpf oeq, %3, %32 : vector<5x128xf32>
    %c5_i32 = arith.constant 5 : i32
    %34 = vector.broadcast %c5_i32 : i32 to vector<5x128xi32>
    %35 = arith.select %33, %13, %34 : vector<5x128xi1>, vector<5x128xi32>
    %cst_8 = arith.constant dense<2147483647> : vector<128xi32>
    %36 = vector.multi_reduction <minsi>, %35, %cst_8 [0] : vector<5x128xi32> to vector<128xi32>
    %37 = vector.shape_cast %36 : vector<128xi32> to vector<1x128xi32>
    %38 = arith.cmpi eq, %37, %4 : vector<1x128xi32>
    %39 = arith.andi %38, %12 : vector<1x128xi1>
    %cst_9 = arith.constant 1.000000e+00 : f32
    %cst_10 = arith.constant 0.000000e+00 : f32
    %40 = vector.broadcast %cst_9 : f32 to vector<1x128xf32>
    %41 = vector.broadcast %cst_10 : f32 to vector<1x128xf32>
    %42 = arith.select %39, %40, %41 : vector<1x128xi1>, vector<1x128xf32>
    %cst_11 = arith.constant dense<0.000000e+00> : vector<1xf32>
    %43 = vector.multi_reduction <add>, %31, %cst_11 [1] : vector<1x128xf32> to vector<1xf32>
    %44 = vector.shape_cast %43 : vector<1xf32> to vector<1x1xf32>
    %cst_12 = arith.constant dense<0.000000e+00> : vector<1xf32>
    %45 = vector.multi_reduction <add>, %42, %cst_12 [1] : vector<1x128xf32> to vector<1xf32>
    %46 = vector.shape_cast %45 : vector<1xf32> to vector<1x1xf32>
    %47 = tpu.iota {dimensions = array<i32: 1>} : vector<1x2xi32>
    %c0_i32_13 = arith.constant 0 : i32
    %48 = vector.broadcast %c0_i32_13 : i32 to vector<1x2xi32>
    %49 = arith.cmpi eq, %47, %48 : vector<1x2xi32>
    %50 = vector.shape_cast %44 : vector<1x1xf32> to vector<1x1xf32>
    %51 = vector.broadcast %50 : vector<1x1xf32> to vector<1x2xf32>
    %52 = vector.shape_cast %46 : vector<1x1xf32> to vector<1x1xf32>
    %53 = vector.broadcast %52 : vector<1x1xf32> to vector<1x2xf32>
    %54 = arith.select %49, %51, %53 : vector<1x2xi1>, vector<1x2xf32>
    %c0_14 = arith.constant 0 : index
    %c0_15 = arith.constant 0 : index
    %c0_16 = arith.constant 0 : index
    %55 = vector.load %arg4[%c0_14, %c0_15, %c0_16] : memref<1x1x2xf32, #tpu.memory_space<vmem>>, vector<1x1x2xf32>
    %56 = vector.shape_cast %54 : vector<1x2xf32> to vector<1x1x2xf32>
    %57 = arith.addf %55, %56 : vector<1x1x2xf32>
    %c0_17 = arith.constant 0 : index
    %c0_18 = arith.constant 0 : index
    %c0_19 = arith.constant 0 : index
    %58 = vector.load %arg4[%c0_17, %c0_18, %c0_19] : memref<1x1x2xf32, #tpu.memory_space<vmem>>, vector<1x1x2xf32>
    tpu.vector_store %arg4[%c0_17, %c0_18, %c0_19], %57 {strides = array<i32>} : memref<1x1x2xf32, #tpu.memory_space<vmem>>, vector<1x1x2xf32>,
    return
  }
  func.func @transform_0(%arg0: i32, %arg1: i32) -> (i32, i32) {
    %c1_i32 = arith.constant 1 : i32
    %0 = arith.muli %arg0, %c1_i32 : i32
    %1 = arith.addi %0, %arg1 : i32
    %c0_i32 = arith.constant 0 : i32
    %c0_i32_0 = arith.constant 0 : i32
    return %c0_i32, %1 : i32, i32
  }
  func.func @transform_1(%arg0: i32, %arg1: i32) -> (i32, i32) {
    %c1_i32 = arith.constant 1 : i32
    %0 = arith.muli %arg0, %c1_i32 : i32
    %1 = arith.addi %0, %arg1 : i32
    %c0_i32 = arith.constant 0 : i32
    %c0_i32_0 = arith.constant 0 : i32
    return %c0_i32, %1 : i32, i32
  }
  func.func @transform_2(%arg0: i32, %arg1: i32) -> (i32, i32, i32) {
    %c0_i32 = arith.constant 0 : i32
    %c0_i32_0 = arith.constant 0 : i32
    %c0_i32_1 = arith.constant 0 : i32
    return %arg0, %c0_i32, %c0_i32_0 : i32, i32, i32
  }
}

</mosaic_0001>

<llo_original>
// kernel: loss_and_accuracy.2
$region0: #{loss_and_accuracy.2}
  #allocation0 [shape = 'u32[]', space=smem, size = 0x4, offset = 0x4, fixed_abs, tag = 'smem constant byte address 0x4 - core index']
  #allocation1 [shape = 'u32[144,128]{1,0:T(1,128)}', space=vmem, size = 0x12000, scoped, tag = 'internal scratch']
  %s0 = inlined_call_operand.vmem [shape: s32[1,15], index: 0, kind: input, shape index: {}]
  %s1 = inlined_call_operand.vmem [shape: f32[15,5], index: 1, kind: input, shape index: {}]
  %s2 = inlined_call_operand.vmem [shape: f32[1,1,2], index: 2, kind: output, shape index: {}]
  %s3 = sld [smem:[#allocation0]]
  $region22: #{loss_and_accuracy.2} parent=0
    _
  %s5 = ssub.s32 1, %s3
  %s6 = scalar_select 0, %s5, %s3
  $region1: #{loss_and_accuracy.2} parent=0
    #allocation2 [shape = 'u8[4096]{0}', space=vmem, size = 0x1000, dematerialized = true, scoped, tag = 'FusionAdapter Buffer %fusion.1 = f32[5,15]{1,0:T(8,128)} fusion(%param_1.1), kind=kLoop, calls=%fused_computation.1.clone, metadata={op_name="jit(loss_and_accuracy)/transpose" stack_frame_id=11}']
    // Predicated region
    $region2: #{loss_and_accuracy.2} parent=1 // pred_check
      _
    $region3: #{loss_and_accuracy.2} parent=1 // pred_check_branch
      %8 = sbr.rel (0) target = $region5
    $region4: #{loss_and_accuracy.2} parent=1 // pred_region
      %s9 = sadd.s32 0, 0
      %p10 = scmp.lt.s32.totalorder %s9, 0
      %s11 = scalar_select %p10, %s9, 0
      %s12 = smul.addr %s11, 8
      %s13 = scalar_lea.vmem %s1, %s12
      %s14 = sadd.s32 0, 0
    $region5: #{loss_and_accuracy.2} parent=1 // pred_fallthru
      _
    // Predicated region
    $region6: #{loss_and_accuracy.2} parent=1 // pred_check
      _
    $region7: #{loss_and_accuracy.2} parent=1 // pred_check_branch
      %16 = sbr.rel (0) target = $region9
    $region8: #{loss_and_accuracy.2} parent=1 // pred_region
      %s17 = sadd.s32 0, 0
      %p18 = scmp.lt.s32.totalorder %s17, 0
      %s19 = scalar_select %p18, %s17, 0
      %s20 = scalar_lea.vmem %s0, %s19
      %s21 = sadd.s32 0, 0
    $region9: #{loss_and_accuracy.2} parent=1 // pred_fallthru
      _
    %s22 = sadd.s32 0, 0
    %p23 = scmp.lt.s32.totalorder %s22, 0
    %s24 = scalar_select %p23, %s22, 0
    %s25 = smul.addr %s24, 8
    %s26 = scalar_lea.vmem %s1, %s25
    %s27 = sadd.s32 0, 0
    %p28 = scmp.lt.s32.totalorder %s27, 0
    %s29 = scalar_select %p28, %s27, 0
    %s30 = scalar_lea.vmem %s0, %s29
    %s31 = sadd.s32 0, 0
    %p32 = scmp.lt.s32.totalorder %s31, 0
    %s33 = scalar_select %p32, %s31, 0
    %s34 = smul.addr %s33, 8
    %s35 = scalar_lea.vmem %s1, %s34
    %s36 = sadd.s32 0, 0
    %s37 = sadd.s32 0, 0
    %p38 = scmp.lt.s32.totalorder %s37, 0
    %s39 = scalar_select %p38, %s37, 0
    %s40 = scalar_lea.vmem %s0, %s39
    %s41 = sadd.s32 0, 0
    %v42 = vld [vmem:[%s35] sm:$0x1f]
    %s44 = ssub.s32 256, 1
    %45 = vst [vmem:[#allocation2] sm:%s44] %v42
    %p46 = scmp.eq.s32.totalorder 0, 0
    // Predicated region
    $region10: #{loss_and_accuracy.2} parent=1 // pred_check
      %p47 = pneg %p46
    $region11: #{loss_and_accuracy.2} parent=1 // pred_check_branch
      %49 = sbr.rel (%p47) target = $region13
    $region12: #{loss_and_accuracy.2} parent=1 // pred_region
      %vm50 = vcmask 8192
      %51 = vst.msk [vmem:[%s2] sm:$0x1] %vm50, 0.0
    $region13: #{loss_and_accuracy.2} parent=1 // pred_fallthru
      _
    %v52 = vld [vmem:[#allocation2] sm:$0x1f]
    %v53 = vld [vmem:[%s40] sm:$0x1]
    %s54 = sadd.s32 0, 0
    %v55 = vlaneseq
    %v56 = vand.u32 %v55, 127
    %s57 = smul.u32 %s54, 128
    %v58 = vstv %s57
    %v59 = vadd.s32 %v56, %v58
    %vm60 = vcmp.lt.s32.totalorder %v59, 15
    %v61 = vlaneseq
    %v62 = vshrl.u32 %v61, 7
    %vm63 = vcmask 1044480
    %v64 = vsel %vm63, %v52, -inf
    %v65 = vrot.slane %v64, 4
    %v66 = vmax.f32 %v64, %v65
    %v67 = vrot.slane %v66, 2
    %v68 = vmax.f32 %v66, %v67
    %v69 = vrot.slane %v68, 1
    %v70 = vmax.f32 %v68, %v69
    %v71 = vsub.f32 %v52, %v70
    %v72 = vmul.f32 %v71, 1.442695
    %v73 = vpow.pop %v72
    %v74 = vsel %vm63, %v73, 0.0
    %v75 = vrot.slane %v74, 4
    %v76 = vadd.f32 %v74, %v75
    %v77 = vrot.slane %v76, 2
    %v78 = vadd.f32 %v76, %v77
    %v79 = vrot.slane %v78, 1
    %v80 = vadd.f32 %v78, %v79
    %v81 = vlog2.pop %v80
    %v82 = vmul.f32 %v81, 0.6931472
    %v83 = vadd.f32 %v70, %v82
    %v84 = vlaneseq
    %v85 = vshrl.u32 %v84, 7
    %v86 = vsub.s32 0, %v85
    %v87 = vrot.slane %v53, %v86
    %vm88 = vcmp.eq.s32.totalorder %v62, %v87
    %v89 = vsel %vm88, %v52, 0.0
    %v90 = vsel %vm63, %v89, 0.0
    %v91 = vrot.slane %v90, 4
    %v92 = vadd.f32 %v90, %v91
    %v93 = vrot.slane %v92, 2
    %v94 = vadd.f32 %v92, %v93
    %v95 = vrot.slane %v94, 1
    %v96 = vadd.f32 %v94, %v95
    %v97 = vsub.f32 %v83, %v96
    %v98 = vsel %vm60, %v97, 0.0
    %vm99 = vcmp.eq.f32.partialorder %v52, %v70
    %v100 = vsel %vm99, %v62, 5
    %v101 = vsel %vm63, %v100, 2147483647
    %v102 = vrot.slane %v101, 4
    %vm103 = vcmp.lt.s32.totalorder %v101, %v102
    %v104 = vsel %vm103, %v101, %v102
    %v105 = vrot.slane %v104, 2
    %vm106 = vcmp.lt.s32.totalorder %v104, %v105
    %v107 = vsel %vm106, %v104, %v105
    %v108 = vrot.slane %v107, 1
    %vm109 = vcmp.lt.s32.totalorder %v107, %v108
    %v110 = vsel %vm109, %v107, %v108
    %vm111 = vcmp.eq.s32.totalorder %v110, %v53
    %vm112 = vmand %vm111, %vm60
    %v113 = vsel %vm112, 1.0, 0.0
    %114 = vadd.xlane.f32.xlu0 %v98
    %v115 = vpop.xlane.xlu0 %114
    %vm116 = vcmask 1040384
    %v117 = vsel %vm116, %v113, 0.0
    %118 = vadd.xlane.f32.xlu0 %v117
    %v119 = vpop.xlane.xlu0 %118
    %vm120 = vcmp.eq.s32.totalorder %v56, 0
    %v121 = vsel %vm120, %v115, %v119
    %v122 = vld [vmem:[%s2] sm:$0x1]
    %v123 = vadd.f32 %v122, %v121
    %vm124 = vcmask 8192
    %125 = vst.msk [vmem:[%s2] sm:$0x1] %vm124, %v123
    // Predicated region
    $region14: #{loss_and_accuracy.2} parent=1 // pred_check
      _
    $region15: #{loss_and_accuracy.2} parent=1 // pred_check_branch
      %127 = sbr.rel (0) target = $region17
    $region16: #{loss_and_accuracy.2} parent=1 // pred_region
      _
    $region17: #{loss_and_accuracy.2} parent=1 // pred_fallthru
      _
    // Predicated region
    $region18: #{loss_and_accuracy.2} parent=1 // pred_check
      _
    $region19: #{loss_and_accuracy.2} parent=1 // pred_check_branch
      %129 = sbr.rel (0) target = $region21
    $region20: #{loss_and_accuracy.2} parent=1 // pred_region
      _
    $region21: #{loss_and_accuracy.2} parent=1 // pred_fallthru
      _

</llo_original>
